<compile_context>
chip_gen: v7x
topology: tpu7x:2x2x1
jax: 0.10.0
libtpu: 0.0.40
codegen_flags: <defaults>
</compile_context>

<pallas_src>
import functools

import jax
import jax.numpy as jnp
from jax.experimental import pallas as pl
from jax.experimental.pallas import tpu as pltpu


def _cdiv(a, b):
    return (a + b - 1) // b


def _round_up(a, m):
    return _cdiv(a, m) * m


def _vae_fused_kernel(x_ref, w1_ref, b1_ref, w2_ref, b2_ref, wo_ref, bo_ref,
                      mask_ref, out_ref):
    # bf16 operands, f32 accumulation (3x fewer MXU passes than f32 matmul).
    # x is streamed f32 and cast on the VPU (it has slack at these shapes).
    x = x_ref[...].astype(jnp.bfloat16)

    # linear_relu_stack: Linear -> ReLU -> Linear -> ReLU
    h1 = jnp.dot(x, w1_ref[...], preferred_element_type=jnp.float32) + b1_ref[...]
    h1 = jnp.maximum(h1, 0.0).astype(jnp.bfloat16)
    h2 = jnp.dot(h1, w2_ref[...], preferred_element_type=jnp.float32) + b2_ref[...]
    h2 = jnp.maximum(h2, 0.0)

    # Fused lane-dense epilogue: one [H, 128] weight packs
    #   lanes [0:H)           -> identity (logits pass-through)
    #   lanes [H:H+L)         -> mu head
    #   lanes [H+L:H+2L)      -> logstd head, pre-scaled by 0.5
    # Kept in f32 so the logits pass-through is not rounded to bf16.
    out = jnp.dot(h2, wo_ref[...], preferred_element_type=jnp.float32) + bo_ref[...]

    # exp only on the sigma lanes; the inner select keeps exp off the (large)
    # logits lanes so it cannot overflow, and the store stays a full-width,
    # unmasked 128-lane store.
    is_sigma = mask_ref[...] != 0.0                    # [1, 128], broadcasts
    out_ref[...] = jnp.where(is_sigma, jnp.exp(jnp.where(is_sigma, out, 0.0)), out)


def make_vae_forward(params, *, block_rows=4096):
    """Packs params once and returns a jitted forward(x) -> (logits, mu, sigma)."""
    w1, b1, w2, b2, wmu, bmu, wls, bls = params
    K, H = w1.shape
    L = wmu.shape[1]

    # Lane-dense packed output width (>=128, multiple of 128).
    out_w = max(128, _round_up(H + 2 * L, 128))
    pad = out_w - (H + 2 * L)

    # --- one-time packing (hoisted out of the per-call path) ---------------
    w1b = w1.astype(jnp.bfloat16)
    w2b = w2.astype(jnp.bfloat16)
    b1_ = b1.reshape(1, H).astype(jnp.float32)
    b2_ = b2.reshape(1, H).astype(jnp.float32)
    # Fused head weight/bias: [I | Wmu | 0.5*Wls | 0], [0 | bmu | 0.5*bls | 0]
    wo = jnp.concatenate(
        [jnp.eye(H, dtype=jnp.float32),
         wmu.astype(jnp.float32),
         0.5 * wls.astype(jnp.float32),
         jnp.zeros((H, pad), jnp.float32)], axis=1)
    bo = jnp.concatenate(
        [jnp.zeros((1, H), jnp.float32),
         bmu.reshape(1, L).astype(jnp.float32),
         0.5 * bls.reshape(1, L).astype(jnp.float32),
         jnp.zeros((1, pad), jnp.float32)], axis=1)
    # sigma-lane mask, computed once (replaces per-tile iota + compares).
    mask = jnp.concatenate(
        [jnp.zeros((1, H + L), jnp.float32),
         jnp.ones((1, L), jnp.float32),
         jnp.zeros((1, pad), jnp.float32)], axis=1)

    @jax.jit
    def forward(x):
        B = x.shape[0]

        # Adaptive row tiling: tiles <= block_rows, >=2 grid steps when B > 8
        # (so v7x's second TensorCore gets a share), padding waste bounded to
        # < one tile.
        num_tiles = max(_cdiv(B, block_rows), 2 if B > 8 else 1)
        tm = _round_up(_cdiv(B, num_tiles), 8)
        grid = _cdiv(B, tm)
        b_pad = grid * tm

        xp = x if b_pad == B else jnp.pad(x, ((0, b_pad - B), (0, 0)))

        # VMEM budget: double-buffered x/out tiles + intra-kernel temporaries;
        # clamp to 48 MiB so it fits v7x's 64 MiB/TC physical VMEM.
        x_tile = tm * _round_up(K, 128) * 4
        out_tile = tm * out_w * 4
        est = 2 * (x_tile + out_tile) + 6 * out_tile + (1 << 20)
        vmem_limit = int(min(max(est, 32 * 1024 * 1024), 48 * 1024 * 1024))

        row = lambda i: (i, 0)   # tiled along batch
        rep = lambda i: (0, 0)   # resident weights/biases/mask

        out = pl.pallas_call(
            _vae_fused_kernel,
            out_shape=jax.ShapeDtypeStruct((b_pad, out_w), jnp.float32),
            grid=(grid,),
            in_specs=[
                pl.BlockSpec((tm, K), row),       # x tile
                pl.BlockSpec((K, H), rep),        # W1 (bf16)
                pl.BlockSpec((1, H), rep),        # b1
                pl.BlockSpec((H, H), rep),        # W2 (bf16)
                pl.BlockSpec((1, H), rep),        # b2
                pl.BlockSpec((H, out_w), rep),    # fused head weight (f32)
                pl.BlockSpec((1, out_w), rep),    # fused head bias
                pl.BlockSpec((1, out_w), rep),    # sigma-lane mask
            ],
            out_specs=pl.BlockSpec((tm, out_w), row),
            compiler_params=pltpu.CompilerParams(
                dimension_semantics=("parallel",),
                vmem_limit_bytes=vmem_limit,
            ),
        )(xp, w1b, b1_, w2b, b2_, wo, bo, mask)

        # Slices happen inside this jit; consumers wanting zero extra copies
        # can take `out` packed instead.
        logits = out[:B, :H]
        mu = out[:B, H:H + L]
        sigma = out[:B, H + L:H + 2 * L]
        return logits, mu, sigma

    return forward


def init_params(key, input_height=68, hidden_layers=64, latent_dim=3):
    """Deterministic synthetic parameters (PyTorch Linear-like uniform init),
    stored as [in, out] so the kernel does x @ W."""
    def linear(k, fan_in, fan_out):
        kw, kb = jax.random.split(k)
        bound = 1.0 / jnp.sqrt(fan_in)
        w = jax.random.uniform(kw, (fan_in, fan_out), jnp.float32, -bound, bound)
        b = jax.random.uniform(kb, (1, fan_out), jnp.float32, -bound, bound)
        return w, b

    k1, k2, k3, k4 = jax.random.split(key, 4)
    w1, b1 = linear(k1, input_height, hidden_layers)
    w2, b2 = linear(k2, hidden_layers, hidden_layers)
    wmu, bmu = linear(k3, hidden_layers, latent_dim)
    wls, bls = linear(k4, hidden_layers, latent_dim)
    return (w1, b1, w2, b2, wmu, bmu, wls, bls)


def vae_forward_ref(x, params):
    """Pure-JAX f32 reference for correctness check."""
    w1, b1, w2, b2, wmu, bmu, wls, bls = params
    h = jnp.maximum(x @ w1 + b1, 0.0)
    h = jnp.maximum(h @ w2 + b2, 0.0)
    mu = h @ wmu + bmu
    sigma = jnp.exp((h @ wls + bls) / 2.0)
    return h, mu, sigma


if __name__ == "__main__":
    key = jax.random.PRNGKey(0)
    kx, kp = jax.random.split(key)

    B, INPUT_H, HIDDEN, LATENT = 8, 68, 64, 3
    x = jax.random.normal(kx, (B, INPUT_H), jnp.float32)
    params = init_params(kp, INPUT_H, HIDDEN, LATENT)

    vae_forward = make_vae_forward(params)
    logits, mu, sigma = jax.block_until_ready(vae_forward(x))

    # Sanity check against the pure-f32 reference. Tolerances are loosened to
    # 2e-2 because the hidden-layer matmuls use bf16 operands (f32 accum).
    r_logits, r_mu, r_sigma = vae_forward_ref(x, params)
    assert logits.shape == (B, HIDDEN)
    assert mu.shape == (B, LATENT) and sigma.shape == (B, LATENT)
    assert jnp.allclose(logits, r_logits, atol=2e-2, rtol=2e-2)
    assert jnp.allclose(mu, r_mu, atol=2e-2, rtol=2e-2)
    assert jnp.allclose(sigma, r_sigma, atol=2e-2, rtol=2e-2)
    assert bool(jnp.all(jnp.isfinite(sigma))) and bool(jnp.all(sigma > 0.0))

    print("KERNEL_OK")
</pallas_src>

<mosaic_0001>
module attributes {stable_mosaic.version = 11 : i64} {
  func.func @_vae_fused_kernel(%arg0: i32, %arg1: memref<8x68xf32, #tpu.memory_space<vmem>>, %arg2: memref<68x64xbf16, #tpu.memory_space<vmem>>, %arg3: memref<1x64xf32, #tpu.memory_space<vmem>>, %arg4: memref<64x64xbf16, #tpu.memory_space<vmem>>, %arg5: memref<1x64xf32, #tpu.memory_space<vmem>>, %arg6: memref<64x128xf32, #tpu.memory_space<vmem>>, %arg7: memref<1x128xf32, #tpu.memory_space<vmem>>, %arg8: memref<1x128xf32, #tpu.memory_space<vmem>>, %arg9: memref<8x128xf32, #tpu.memory_space<vmem>>) attributes {dimension_semantics = [#tpu.dimension_semantics<parallel>], iteration_bounds = array<i64: 1>, scalar_prefetch = 0 : i64, scratch_operands = 0 : i64, tpu.core_type = #tpu.core_type<tc>, window_params = [{transform_indices = @transform_0, window_bounds = array<i64: 8, 68>}, {pipeline_mode = #tpu.pipeline_mode<synchronous>, transform_indices = @transform_1, window_bounds = array<i64: 68, 64>}, {pipeline_mode = #tpu.pipeline_mode<synchronous>, transform_indices = @transform_2, window_bounds = array<i64: 1, 64>}, {pipeline_mode = #tpu.pipeline_mode<synchronous>, transform_indices = @transform_3, window_bounds = array<i64: 64, 64>}, {pipeline_mode = #tpu.pipeline_mode<synchronous>, transform_indices = @transform_4, window_bounds = array<i64: 1, 64>}, {pipeline_mode = #tpu.pipeline_mode<synchronous>, transform_indices = @transform_5, window_bounds = array<i64: 64, 128>}, {pipeline_mode = #tpu.pipeline_mode<synchronous>, transform_indices = @transform_6, window_bounds = array<i64: 1, 128>}, {pipeline_mode = #tpu.pipeline_mode<synchronous>, transform_indices = @transform_7, window_bounds = array<i64: 1, 128>}, {transform_indices = @transform_8, window_bounds = array<i64: 8, 128>}]} {
    %c0 = arith.constant 0 : index
    %c0_0 = arith.constant 0 : index
    %0 = vector.load %arg1[%c0, %c0_0] : memref<8x68xf32, #tpu.memory_space<vmem>>, vector<8x68xf32>
    %1 = arith.truncf %0 : vector<8x68xf32> to vector<8x68xbf16>
    %c0_1 = arith.constant 0 : index
    %c0_2 = arith.constant 0 : index
    %2 = vector.load %arg2[%c0_1, %c0_2] : memref<68x64xbf16, #tpu.memory_space<vmem>>, vector<68x64xbf16>
    %cst = arith.constant dense<0.000000e+00> : vector<8x64xf32>
    %3 = tpu.matmul %1, %2, %cst {dimension_numbers = #tpu.dot_dimension_numbers<[1], [0], [0], [1], [0, 0, 1, 1], [], []>} : vector<8x68xbf16>, vector<68x64xbf16>, vector<8x64xf32> -> vector<8x64xf32>
    %c0_3 = arith.constant 0 : index
    %c0_4 = arith.constant 0 : index
    %4 = vector.load %arg3[%c0_3, %c0_4] : memref<1x64xf32, #tpu.memory_space<vmem>>, vector<1x64xf32>
    %5 = vector.broadcast %4 : vector<1x64xf32> to vector<8x64xf32>
    %6 = arith.addf %3, %5 : vector<8x64xf32>
    %cst_5 = arith.constant 0.000000e+00 : f32
    %7 = vector.broadcast %cst_5 : f32 to vector<8x64xf32>
    %8 = arith.maximumf %6, %7 : vector<8x64xf32>
    %9 = arith.truncf %8 : vector<8x64xf32> to vector<8x64xbf16>
    %c0_6 = arith.constant 0 : index
    %c0_7 = arith.constant 0 : index
    %10 = vector.load %arg4[%c0_6, %c0_7] : memref<64x64xbf16, #tpu.memory_space<vmem>>, vector<64x64xbf16>
    %cst_8 = arith.constant dense<0.000000e+00> : vector<8x64xf32>
    %11 = tpu.matmul %9, %10, %cst_8 {dimension_numbers = #tpu.dot_dimension_numbers<[1], [0], [0], [1], [0, 0, 1, 1], [], []>} : vector<8x64xbf16>, vector<64x64xbf16>, vector<8x64xf32> -> vector<8x64xf32>
    %c0_9 = arith.constant 0 : index
    %c0_10 = arith.constant 0 : index
    %12 = vector.load %arg5[%c0_9, %c0_10] : memref<1x64xf32, #tpu.memory_space<vmem>>, vector<1x64xf32>
    %13 = vector.broadcast %12 : vector<1x64xf32> to vector<8x64xf32>
    %14 = arith.addf %11, %13 : vector<8x64xf32>
    %cst_11 = arith.constant 0.000000e+00 : f32
    %15 = vector.broadcast %cst_11 : f32 to vector<8x64xf32>
    %16 = arith.maximumf %14, %15 : vector<8x64xf32>
    %c0_12 = arith.constant 0 : index
    %c0_13 = arith.constant 0 : index
    %17 = vector.load %arg6[%c0_12, %c0_13] : memref<64x128xf32, #tpu.memory_space<vmem>>, vector<64x128xf32>
    %cst_14 = arith.constant dense<0.000000e+00> : vector<8x128xf32>
    %18 = tpu.matmul %16, %17, %cst_14 {dimension_numbers = #tpu.dot_dimension_numbers<[1], [0], [0], [1], [0, 0, 1, 1], [], []>} : vector<8x64xf32>, vector<64x128xf32>, vector<8x128xf32> -> vector<8x128xf32>
    %c0_15 = arith.constant 0 : index
    %c0_16 = arith.constant 0 : index
    %19 = vector.load %arg7[%c0_15, %c0_16] : memref<1x128xf32, #tpu.memory_space<vmem>>, vector<1x128xf32>
    %20 = vector.broadcast %19 : vector<1x128xf32> to vector<8x128xf32>
    %21 = arith.addf %18, %20 : vector<8x128xf32>
    %c0_17 = arith.constant 0 : index
    %c0_18 = arith.constant 0 : index
    %22 = vector.load %arg8[%c0_17, %c0_18] : memref<1x128xf32, #tpu.memory_space<vmem>>, vector<1x128xf32>
    %cst_19 = arith.constant 0.000000e+00 : f32
    %23 = vector.broadcast %cst_19 : f32 to vector<1x128xf32>
    %24 = arith.cmpf one, %22, %23 : vector<1x128xf32>
    %cst_20 = arith.constant 0.000000e+00 : f32
    %25 = vector.shape_cast %24 : vector<1x128xi1> to vector<1x128xi1>
    %26 = vector.broadcast %25 : vector<1x128xi1> to vector<8x128xi1>
    %27 = vector.broadcast %cst_20 : f32 to vector<8x128xf32>
    %28 = arith.select %26, %21, %27 : vector<8x128xi1>, vector<8x128xf32>
    %29 = math.exp %28 : vector<8x128xf32>
    %30 = vector.shape_cast %24 : vector<1x128xi1> to vector<1x128xi1>
    %31 = vector.broadcast %30 : vector<1x128xi1> to vector<8x128xi1>
    %32 = arith.select %31, %29, %21 : vector<8x128xi1>, vector<8x128xf32>
    %c0_21 = arith.constant 0 : index
    %c0_22 = arith.constant 0 : index
    %33 = vector.load %arg9[%c0_21, %c0_22] : memref<8x128xf32, #tpu.memory_space<vmem>>, vector<8x128xf32>
    tpu.vector_store %arg9[%c0_21, %c0_22], %32 {strides = array<i32>} : memref<8x128xf32, #tpu.memory_space<vmem>>, vector<8x128xf32>,
    return
  }
  func.func @transform_0(%arg0: i32) -> (i32, i32) {
    %c0_i32 = arith.constant 0 : i32
    %c0_i32_0 = arith.constant 0 : i32
    return %arg0, %c0_i32 : i32, i32
  }
  func.func @transform_1(%arg0: i32) -> (i32, i32) {
    %c0_i32 = arith.constant 0 : i32
    %c0_i32_0 = arith.constant 0 : i32
    %c0_i32_1 = arith.constant 0 : i32
    return %c0_i32, %c0_i32_0 : i32, i32
  }
  func.func @transform_2(%arg0: i32) -> (i32, i32) {
    %c0_i32 = arith.constant 0 : i32
    %c0_i32_0 = arith.constant 0 : i32
    %c0_i32_1 = arith.constant 0 : i32
    return %c0_i32, %c0_i32_0 : i32, i32
  }
  func.func @transform_3(%arg0: i32) -> (i32, i32) {
    %c0_i32 = arith.constant 0 : i32
    %c0_i32_0 = arith.constant 0 : i32
    %c0_i32_1 = arith.constant 0 : i32
    return %c0_i32, %c0_i32_0 : i32, i32
  }
  func.func @transform_4(%arg0: i32) -> (i32, i32) {
    %c0_i32 = arith.constant 0 : i32
    %c0_i32_0 = arith.constant 0 : i32
    %c0_i32_1 = arith.constant 0 : i32
    return %c0_i32, %c0_i32_0 : i32, i32
  }
  func.func @transform_5(%arg0: i32) -> (i32, i32) {
    %c0_i32 = arith.constant 0 : i32
    %c0_i32_0 = arith.constant 0 : i32
    %c0_i32_1 = arith.constant 0 : i32
    return %c0_i32, %c0_i32_0 : i32, i32
  }
  func.func @transform_6(%arg0: i32) -> (i32, i32) {
    %c0_i32 = arith.constant 0 : i32
    %c0_i32_0 = arith.constant 0 : i32
    %c0_i32_1 = arith.constant 0 : i32
    return %c0_i32, %c0_i32_0 : i32, i32
  }
  func.func @transform_7(%arg0: i32) -> (i32, i32) {
    %c0_i32 = arith.constant 0 : i32
    %c0_i32_0 = arith.constant 0 : i32
    %c0_i32_1 = arith.constant 0 : i32
    return %c0_i32, %c0_i32_0 : i32, i32
  }
  func.func @transform_8(%arg0: i32) -> (i32, i32) {
    %c0_i32 = arith.constant 0 : i32
    %c0_i32_0 = arith.constant 0 : i32
    return %arg0, %c0_i32 : i32, i32
  }
}

</mosaic_0001>

<llo_original>
// kernel: forward.1
$region0: #{forward.1}
  #allocation0 [shape = 'u32[]', space=smem, size = 0x4, offset = 0x4, fixed_abs, tag = 'smem constant byte address 0x4 - core index']
  #allocation1 [shape = 'u32[144,128]{1,0:T(1,128)}', space=vmem, size = 0x12000, scoped, tag = 'internal scratch']
  %s0 = inlined_call_operand.hbm [shape: f32[8,68], index: 0, kind: input, shape index: {}]
  %s1 = inlined_call_operand.hbm [shape: bf16[68,64], index: 1, kind: input, shape index: {}]
  %s2 = inlined_call_operand.vmem [shape: f32[1,64], index: 2, kind: input, shape index: {}]
  %s3 = inlined_call_operand.hbm [shape: bf16[64,64], index: 3, kind: input, shape index: {}]
  %s4 = inlined_call_operand.vmem [shape: f32[1,64], index: 4, kind: input, shape index: {}]
  %s5 = inlined_call_operand.hbm [shape: f32[64,128], index: 5, kind: input, shape index: {}]
  %s6 = inlined_call_operand.vmem [shape: f32[1,128], index: 6, kind: input, shape index: {}]
  %s7 = inlined_call_operand.vmem [shape: f32[1,128], index: 7, kind: input, shape index: {}]
  %s8 = inlined_call_operand.vmem [shape: f32[8,128], index: 8, kind: output, shape index: {}]
  %s9 = sld [smem:[#allocation0]]
  $region58: #{forward.1} parent=0
    _
  %s11 = ssub.s32 1, %s9
  %s12 = scalar_select 0, %s11, %s9
  $region1: #{forward.1} parent=0
    #allocation2 [shape = 'u8[4096]{0}', space=vmem, size = 0x1000, scoped, tag = 'input window, operand 0, single buffered']
    #allocation3 [shape = 's32[1]{0}', space=sflag, size = 0x4, scoped, tag = 'scoped memory for forward.1']
    #allocation4 [shape = 'u8[18432]{0}', space=vmem, size = 0x4800, scoped, tag = 'input window, operand 1, single buffered']
    #allocation5 [shape = 's32[1]{0}', space=sflag, size = 0x4, scoped, tag = 'scoped memory for forward.1']
    #allocation6 [shape = 'u8[16384]{0}', space=vmem, size = 0x4000, scoped, tag = 'input window, operand 3, single buffered']
    #allocation7 [shape = 'u8[32768]{0}', space=vmem, size = 0x8000, scoped, tag = 'input window, operand 5, single buffered']
    #allocation8 [shape = 's32[1]{0}', space=sflag, size = 0x4, scoped, tag = 'scoped memory for forward.1']
    %13 = vsyncpa [#allocation3], 0
    %14 = vsyncpa [#allocation5], 0
    %15 = vsyncpa [#allocation8], 0
    // Predicated region
    $region2: #{forward.1} parent=1 // pred_check
      _
    $region3: #{forward.1} parent=1 // pred_check_branch
      %17 = sbr.rel (0) target = $region5
    $region4: #{forward.1} parent=1 // pred_region
      %s19 = ssub.s32 128, 128
      %20 = vsyncadd [#allocation3], %s19
      %s22 = sshll.u32 [#allocation2], 4
      %s23 = int_to_ptr.vmem [resolvable:$true] %s22
      %25 = dma.hbm_to_vmem [thread:$0]  %s0, 128, %s23, [#allocation3]
    $region5: #{forward.1} parent=1 // pred_fallthru
      _
    // Predicated region
    $region6: #{forward.1} parent=1 // pred_check
      _
    $region7: #{forward.1} parent=1 // pred_check_branch
      %27 = sbr.rel (0) target = $region9
    $region8: #{forward.1} parent=1 // pred_region
      %s29 = ssub.s32 576, 576
      %30 = vsyncadd [#allocation5], %s29
      %s31 = sshll.u32 [#allocation4], 4
      %s32 = int_to_ptr.vmem [resolvable:$true] %s31
      %37 = dma.hbm_to_vmem [thread:$0]  %s1, 576, %s32, [#allocation5], 64, 64, 4
    $region9: #{forward.1} parent=1 // pred_fallthru
      _
    // Predicated region
    $region10: #{forward.1} parent=1 // pred_check
      _
    $region11: #{forward.1} parent=1 // pred_check_branch
      %39 = sbr.rel (0) target = $region13
    $region12: #{forward.1} parent=1 // pred_region
      _
    $region13: #{forward.1} parent=1 // pred_fallthru
      _
    // Predicated region
    $region14: #{forward.1} parent=1 // pred_check
      _
    $region15: #{forward.1} parent=1 // pred_check_branch
      %41 = sbr.rel (0) target = $region17
    $region16: #{forward.1} parent=1 // pred_region
      %s43 = ssub.s32 512, 512
      %44 = vsyncadd [#allocation5], %s43
      %s45 = sshll.u32 [#allocation6], 4
      %s46 = int_to_ptr.vmem [resolvable:$true] %s45
      %51 = dma.hbm_to_vmem [thread:$0]  %s3, 512, %s46, [#allocation5], 64, 64, 4
    $region17: #{forward.1} parent=1 // pred_fallthru
      _
    // Predicated region
    $region18: #{forward.1} parent=1 // pred_check
      _
    $region19: #{forward.1} parent=1 // pred_check_branch
      %53 = sbr.rel (0) target = $region21
    $region20: #{forward.1} parent=1 // pred_region
      _
    $region21: #{forward.1} parent=1 // pred_fallthru
      _
    // Predicated region
    $region22: #{forward.1} parent=1 // pred_check
      _
    $region23: #{forward.1} parent=1 // pred_check_branch
      %55 = sbr.rel (0) target = $region25
    $region24: #{forward.1} parent=1 // pred_region
      %s57 = ssub.s32 1024, 1024
      %58 = vsyncadd [#allocation8], %s57
      %s59 = sshll.u32 [#allocation7], 4
      %s60 = int_to_ptr.vmem [resolvable:$true] %s59
      %65 = dma.hbm_to_vmem [thread:$0]  %s5, 1024, %s60, [#allocation8], 128, 128, 8
    $region25: #{forward.1} parent=1 // pred_fallthru
      _
    // Predicated region
    $region26: #{forward.1} parent=1 // pred_check
      _
    $region27: #{forward.1} parent=1 // pred_check_branch
      %67 = sbr.rel (0) target = $region29
    $region28: #{forward.1} parent=1 // pred_region
      _
    $region29: #{forward.1} parent=1 // pred_fallthru
      _
    // Predicated region
    $region30: #{forward.1} parent=1 // pred_check
      _
    $region31: #{forward.1} parent=1 // pred_check_branch
      %69 = sbr.rel (0) target = $region33
    $region32: #{forward.1} parent=1 // pred_region
      _
    $region33: #{forward.1} parent=1 // pred_fallthru
      _
    // Predicated region
    $region34: #{forward.1} parent=1 // pred_check
      _
    $region35: #{forward.1} parent=1 // pred_check_branch
      %71 = sbr.rel (0) target = $region37
    $region36: #{forward.1} parent=1 // pred_region
      %72 = dma.done [#allocation3], 128
    $region37: #{forward.1} parent=1 // pred_fallthru
      _
    // Predicated region
    $region38: #{forward.1} parent=1 // pred_check
      _
    $region39: #{forward.1} parent=1 // pred_check_branch
      %74 = sbr.rel (0) target = $region41
    $region40: #{forward.1} parent=1 // pred_region
      %75 = dma.done [#allocation5], 576
    $region41: #{forward.1} parent=1 // pred_fallthru
      _
    // Predicated region
    $region42: #{forward.1} parent=1 // pred_check
      _
    $region43: #{forward.1} parent=1 // pred_check_branch
      %77 = sbr.rel (0) target = $region45
    $region44: #{forward.1} parent=1 // pred_region
      %78 = dma.done [#allocation5], 512
    $region45: #{forward.1} parent=1 // pred_fallthru
      _
    // Predicated region
    $region46: #{forward.1} parent=1 // pred_check
      _
    $region47: #{forward.1} parent=1 // pred_check_branch
      %80 = sbr.rel (0) target = $region49
    $region48: #{forward.1} parent=1 // pred_region
      %81 = dma.done [#allocation8], 1024
    $region49: #{forward.1} parent=1 // pred_fallthru
      _
    %v83 = vld [vmem:[#allocation2] sm:$0xff]
    %v84 = vpack.c.bf16 %v83, %v83
    %v85 = vld [vmem:[#allocation4] sm:$0xf]
    %v86 = vld [vmem:[#allocation4 + $0x4] sm:$0xf]
    %v87 = vld [vmem:[#allocation4 + $0x8] sm:$0xf]
    %v88 = vld [vmem:[#allocation4 + $0xc] sm:$0xf]
    %v89 = vld [vmem:[#allocation4 + $0x10] sm:$0xf]
    %v90 = vld [vmem:[#allocation4 + $0x14] sm:$0xf]
    %v91 = vld [vmem:[#allocation4 + $0x18] sm:$0xf]
    %v92 = vld [vmem:[#allocation4 + $0x1c] sm:$0xf]
    %v93 = vld [vmem:[#allocation4 + $0x20] sm:$0x3]
    %v94 = vld [vmem:[%s2] sm:$0x1]
    %v96 = vlaneseq
    %v97 = vshrl.u32 %v96, 7
    %v98 = vsub.s32 0, %v97
    %v99 = vrot.slane %v94, %v98
    %v110 = vunpack.c.l.b16 %v85
    %v111 = vunpack.c.l.b16 %v86
    %v112 = vunpack.c.l.b16 %v87
    %v113 = vunpack.c.l.b16 %v88
    %v114 = vunpack.c.l.b16 %v89
    %v115 = vunpack.c.l.b16 %v90
    %v116 = vunpack.c.l.b16 %v91
    %v117 = vunpack.c.l.b16 %v92
    %v118 = vunpack.c.l.b16 %v93
    %v119 = vpack.c.b16 %v111, %v110
    %v120 = vpack.c.b16 %v113, %v112
    %v121 = vpack.c.b16 %v115, %v114
    %v122 = vpack.c.b16 %v117, %v116
    %v123 = vpack.c.b16 %v118, %v118
    %vm128 = vcmask 556032
    %v130 = vsel %vm128, %v84, 0
    %vm132 = vcmask 1041408
    %v134 = vsel %vm132, %v123, 0
    %136 = vmatprep.subr.bf16.mxu0 0
    %137 = vmatpush1.bf16.msra.mxu0 %v119
    %138 = vmatprep.subr.bf16.mxu0 0
    %139 = vmatpush1.bf16.msra.mxu0 %v120
    %140 = vmatprep.subr.bf16.mxu0 0
    %141 = vmatpush1.bf16.msra.mxu0 %v121
    %142 = vmatprep.subr.bf16.mxu0 0
    %143 = vmatpush1.bf16.msra.mxu0 %v122
    %144 = vmatprep.subr.bf16.mxu0 0
    %145 = vmatpush1.bf16.msra.mxu0 %v134
    %146 = vmatprep.subr.bf16.mxu0 0
    %147 = vmatpush1.bf16.msra.mxu0 0
    %148 = vmatprep.subr.bf16.mxu0 0
    %149 = vmatpush1.bf16.msra.mxu0 0
    %150 = vmatprep.subr.bf16.mxu0 0
    %151 = vmatpush1.bf16.msra.mxu0 0
    %152 = vmatprep.subr.bf16.mxu0 0
    %153 = vmatpush1.bf16.msra.mxu0 0
    %154 = vmatprep.subr.bf16.mxu0 0
    %155 = vmatpush1.bf16.msra.mxu0 0
    %156 = vmatprep.subr.bf16.mxu0 0
    %157 = vmatpush1.bf16.msra.mxu0 0
    %158 = vmatprep.subr.bf16.mxu0 0
    %159 = vmatpush1.bf16.msra.mxu0 0
    %160 = vmatprep.subr.bf16.mxu0 0
    %161 = vmatpush1.bf16.msra.mxu0 0
    %162 = vmatprep.subr.bf16.mxu0 0
    %163 = vmatpush1.bf16.msra.mxu0 0
    %164 = vmatprep.subr.bf16.mxu0 0
    %165 = vmatpush1.bf16.msra.mxu0 0
    %166 = vmatprep.subr.bf16.mxu0 0
    %167 = vmatpush1.bf16.msra.mxu0 0
    %168 = vmatprep.mubr.bf16.mxu0 0
    %169 = vmatmul.mubr.bf16.gmra.mrb[0].mxu0 %v130
    %v170 = vpop.f32.mrb[0].mxu0
    %v171 = vadd.f32 %v99, %v170
    %v172 = vpop.f32.mrb[0].mxu0
    %v173 = vpop.f32.mrb[0].mxu0
    %v174 = vpop.f32.mrb[0].mxu0
    %175 = vdwg.mxu0
    %v176 = vmax.f32 %v171, 0.0
    %v177 = vpack.c.bf16 %v176, %v176
    %v178 = vld [vmem:[#allocation6] sm:$0xf]
    %v179 = vld [vmem:[#allocation6 + $0x4] sm:$0xf]
    %v180 = vld [vmem:[#allocation6 + $0x8] sm:$0xf]
    %v181 = vld [vmem:[#allocation6 + $0xc] sm:$0xf]
    %v182 = vld [vmem:[#allocation6 + $0x10] sm:$0xf]
    %v183 = vld [vmem:[#allocation6 + $0x14] sm:$0xf]
    %v184 = vld [vmem:[#allocation6 + $0x18] sm:$0xf]
    %v185 = vld [vmem:[#allocation6 + $0x1c] sm:$0xf]
    %v186 = vld [vmem:[%s4] sm:$0x1]
    %v188 = vlaneseq
    %v189 = vshrl.u32 %v188, 7
    %v190 = vsub.s32 0, %v189
    %v191 = vrot.slane %v186, %v190
    %v201 = vunpack.c.l.b16 %v178
    %v202 = vunpack.c.l.b16 %v179
    %v203 = vunpack.c.l.b16 %v180
    %v204 = vunpack.c.l.b16 %v181
    %v205 = vunpack.c.l.b16 %v182
    %v206 = vunpack.c.l.b16 %v183
    %v207 = vunpack.c.l.b16 %v184
    %v208 = vunpack.c.l.b16 %v185
    %v209 = vpack.c.b16 %v202, %v201
    %v210 = vpack.c.b16 %v204, %v203
    %v211 = vpack.c.b16 %v206, %v205
    %v212 = vpack.c.b16 %v208, %v207
    %vm217 = vcmask 523264
    %v219 = vsel %vm217, %v177, 0
    %221 = vmatprep.subr.bf16.mxu0 0
    %222 = vmatpush1.bf16.msra.mxu0 %v209
    %223 = vmatprep.subr.bf16.mxu0 0
    %224 = vmatpush1.bf16.msra.mxu0 %v210
    %225 = vmatprep.subr.bf16.mxu0 0
    %226 = vmatpush1.bf16.msra.mxu0 %v211
    %227 = vmatprep.subr.bf16.mxu0 0
    %228 = vmatpush1.bf16.msra.mxu0 %v212
    %229 = vmatprep.subr.bf16.mxu0 0
    %230 = vmatpush1.bf16.msra.mxu0 0
    %231 = vmatprep.subr.bf16.mxu0 0
    %232 = vmatpush1.bf16.msra.mxu0 0
    %233 = vmatprep.subr.bf16.mxu0 0
    %234 = vmatpush1.bf16.msra.mxu0 0
    %235 = vmatprep.subr.bf16.mxu0 0
    %236 = vmatpush1.bf16.msra.mxu0 0
    %237 = vmatprep.subr.bf16.mxu0 0
    %238 = vmatpush1.bf16.msra.mxu0 0
    %239 = vmatprep.subr.bf16.mxu0 0
    %240 = vmatpush1.bf16.msra.mxu0 0
    %241 = vmatprep.subr.bf16.mxu0 0
    %242 = vmatpush1.bf16.msra.mxu0 0
    %243 = vmatprep.subr.bf16.mxu0 0
    %244 = vmatpush1.bf16.msra.mxu0 0
    %245 = vmatprep.subr.bf16.mxu0 0
    %246 = vmatpush1.bf16.msra.mxu0 0
    %247 = vmatprep.subr.bf16.mxu0 0
    %248 = vmatpush1.bf16.msra.mxu0 0
    %249 = vmatprep.subr.bf16.mxu0 0
    %250 = vmatpush1.bf16.msra.mxu0 0
    %251 = vmatprep.subr.bf16.mxu0 0
    %252 = vmatpush1.bf16.msra.mxu0 0
    %253 = vmatprep.mubr.bf16.mxu0 0
    %254 = vmatmul.mubr.bf16.gmra.mrb[0].mxu0 %v219
    %v255 = vpop.f32.mrb[0].mxu0
    %v256 = vadd.f32 %v191, %v255
    %v257 = vpop.f32.mrb[0].mxu0
    %v258 = vpop.f32.mrb[0].mxu0
    %v259 = vpop.f32.mrb[0].mxu0
    %260 = vdwg.mxu0
    %v261 = vmax.f32 %v256, 0.0
    %v262 = vld [vmem:[#allocation7] sm:$0xff]
    %v263 = vld [vmem:[#allocation7 + $0x8] sm:$0xff]
    %v264 = vld [vmem:[#allocation7 + $0x10] sm:$0xff]
    %v265 = vld [vmem:[#allocation7 + $0x18] sm:$0xff]
    %v266 = vld [vmem:[#allocation7 + $0x20] sm:$0xff]
    %v267 = vld [vmem:[#allocation7 + $0x28] sm:$0xff]
    %v268 = vld [vmem:[#allocation7 + $0x30] sm:$0xff]
    %v269 = vld [vmem:[#allocation7 + $0x38] sm:$0xff]
    %v270 = vld [vmem:[%s6] sm:$0x1]
    %v272 = vlaneseq
    %v273 = vshrl.u32 %v272, 7
    %v274 = vsub.s32 0, %v273
    %v275 = vrot.slane %v270, %v274
    %v278 = vsel %vm217, %v261, 0
    %280 = vmatprep.subr.mxu0 0.0
    %281 = vmatpush1.msra.mxu0 %v262
    %282 = vmatprep.subr.mxu0 0.0
    %283 = vmatpush1.msra.mxu0 %v263
    %284 = vmatprep.subr.mxu0 0.0
    %285 = vmatpush1.msra.mxu0 %v264
    %286 = vmatprep.subr.mxu0 0.0
    %287 = vmatpush1.msra.mxu0 %v265
    %288 = vmatprep.subr.mxu0 0.0
    %289 = vmatpush1.msra.mxu0 %v266
    %290 = vmatprep.subr.mxu0 0.0
    %291 = vmatpush1.msra.mxu0 %v267
    %292 = vmatprep.subr.mxu0 0.0
    %293 = vmatpush1.msra.mxu0 %v268
    %294 = vmatprep.subr.mxu0 0.0
    %295 = vmatpush1.msra.mxu0 %v269
    %296 = vmatprep.subr.mxu0 0.0
    %297 = vmatpush1.msra.mxu0 0.0
    %298 = vmatprep.subr.mxu0 0.0
    %299 = vmatpush1.msra.mxu0 0.0
    %300 = vmatprep.subr.mxu0 0.0
    %301 = vmatpush1.msra.mxu0 0.0
    %302 = vmatprep.subr.mxu0 0.0
    %303 = vmatpush1.msra.mxu0 0.0
    %304 = vmatprep.subr.mxu0 0.0
    %305 = vmatpush1.msra.mxu0 0.0
    %306 = vmatprep.subr.mxu0 0.0
    %307 = vmatpush1.msra.mxu0 0.0
    %308 = vmatprep.subr.mxu0 0.0
    %309 = vmatpush1.msra.mxu0 0.0
    %310 = vmatprep.subr.mxu0 0.0
    %311 = vmatpush1.msra.mxu0 0.0
    %312 = vmatprep.subr.mxu0 0.0
    %313 = vmatpush1.msra.mxu0 0.0
    %314 = vmatprep.subr.mxu0 0.0
    %315 = vmatpush1.msra.mxu0 0.0
    %316 = vmatprep.subr.mxu0 0.0
    %317 = vmatpush1.msra.mxu0 0.0
    %318 = vmatprep.subr.mxu0 0.0
    %319 = vmatpush1.msra.mxu0 0.0
    %320 = vmatprep.subr.mxu0 0.0
    %321 = vmatpush1.msra.mxu0 0.0
    %322 = vmatprep.subr.mxu0 0.0
    %323 = vmatpush1.msra.mxu0 0.0
    %324 = vmatprep.subr.mxu0 0.0
    %325 = vmatpush1.msra.mxu0 0.0
    %326 = vmatprep.subr.mxu0 0.0
    %327 = vmatpush1.msra.mxu0 0.0
    %328 = vmatprep.subr.mxu0 0.0
    %329 = vmatpush1.msra.mxu0 0.0
    %330 = vmatprep.subr.mxu0 0.0
    %331 = vmatpush1.msra.mxu0 0.0
    %332 = vmatprep.subr.mxu0 0.0
    %333 = vmatpush1.msra.mxu0 0.0
    %334 = vmatprep.subr.mxu0 0.0
    %335 = vmatpush1.msra.mxu0 0.0
    %336 = vmatprep.subr.mxu0 0.0
    %337 = vmatpush1.msra.mxu0 0.0
    %338 = vmatprep.subr.mxu0 0.0
    %339 = vmatpush1.msra.mxu0 0.0
    %340 = vmatprep.subr.mxu0 0.0
    %341 = vmatpush1.msra.mxu0 0.0
    %342 = vmatprep.subr.mxu0 0.0
    %343 = vmatpush1.msra.mxu0 0.0
    %344 = vmatprep.mubr.f32.mxu0 0.0
    %345 = vmatmul.mubr.f32.gmra.mrb[0].mxu0 %v278
    %v346 = vpop.f32.mrb[0].mxu0
    %v347 = vadd.f32 %v275, %v346
    %v348 = vpop.f32.mrb[0].mxu0
    %349 = vdwg.mxu0
    %v350 = vld [vmem:[%s7] sm:$0x1]
    %vm351 = vcmp.ne.f32.partialorder %v350, 0.0
    %v352 = vsel %vm351, 1, 0
    %v353 = vlaneseq
    %v354 = vshrl.u32 %v353, 7
    %v355 = vsub.s32 0, %v354
    %v356 = vrot.slane %v352, %v355
    %vm357 = vcmp.eq.s32.totalorder %v356, 1
    %v358 = vsel %vm357, %v347, 0.0
    %v359 = vmul.f32 %v358, 1.442695
    %v360 = vpow.pop %v359
    %v361 = vsel %vm357, %v360, %v347
    %362 = vst [vmem:[%s8] sm:$0xff] %v361
    // Predicated region
    $region50: #{forward.1} parent=1 // pred_check
      _
    $region51: #{forward.1} parent=1 // pred_check_branch
      %364 = sbr.rel (0) target = $region53
    $region52: #{forward.1} parent=1 // pred_region
      _
    $region53: #{forward.1} parent=1 // pred_fallthru
      _
    // Predicated region
    $region54: #{forward.1} parent=1 // pred_check
      _
    $region55: #{forward.1} parent=1 // pred_check_branch
      %366 = sbr.rel (0) target = $region57
    $region56: #{forward.1} parent=1 // pred_region
      _
    $region57: #{forward.1} parent=1 // pred_fallthru
      _
    %367 = vsyncpa [#allocation3], 1
    %368 = vsyncpa [#allocation5], 1
    %369 = vsyncpa [#allocation8], 1

</llo_original>
